<compile_context>
chip_gen: v6e
topology: v6e:2x2x1
jax: 0.10.0
libtpu: 0.0.40
codegen_flags: <defaults>
</compile_context>

<pallas_src>
import functools

import jax
import jax.numpy as jnp
from jax.experimental import pallas as pl
from jax.experimental.pallas import tpu as pltpu

_LANES = 128


def _round_up(a: int, m: int) -> int:
    return ((a + m - 1) // m) * m


def _int_pow(x, n: int):
    """x**n for integer n >= 1 via square-and-multiply, unrolled at trace time."""
    result = None
    base = x
    while n > 0:
        if n & 1:
            result = base if result is None else result * base
        n >>= 1
        if n:
            base = base * base
    return result


def _poly_cutoff_kernel(x_ref, o_ref, *, factor: float, p: float):
    # Compute in f32 regardless of the I/O dtype.
    x = x_ref[...].astype(jnp.float32) * jnp.float32(factor)

    # Static coefficients (trace-time Python floats).
    c1 = (p + 1.0) * (p + 2.0) / 2.0
    c2 = p * (p + 2.0)
    c3 = p * (p + 1.0) / 2.0

    p_int = int(p)
    if float(p_int) == float(p) and p_int >= 1:
        # VALU multiply chain (3 muls for p=6); avoids exp/log and is exact
        # at x == 0 (no NaN from log).
        xp = _int_pow(x, p_int)
    else:
        xp = jnp.power(x, jnp.float32(p))  # fallback for non-integer p

    # Horner form of 1 - c1*x^p + c2*x^(p+1) - c3*x^(p+2)
    out = 1.0 - xp * (c1 - x * (c2 - c3 * x))
    out = jnp.where(x < 1.0, out, 0.0)
    o_ref[...] = out.astype(o_ref.dtype)


def _poly_cutoff_ref(x, factor, p=6.0):
    """Pure-JAX reference matching the torch.jit.script function exactly."""
    x = x * factor
    out = 1.0
    out = out - (p + 1.0) * (p + 2.0) / 2.0 * jnp.power(x, p)
    out = out + p * (p + 2.0) * jnp.power(x, p + 1.0)
    out = out - p * (p + 1.0) / 2.0 * jnp.power(x, p + 2.0)
    return out * (x < 1.0).astype(out.dtype)


class PolynominalCutoff:
    """JAX / Pallas port of the PyTorch PolynominalCutoff module."""

    def __init__(self, r_max: float, p: float = 6.0, *,
                 max_block_rows: int = 2048, min_pallas_size: int = 1024):
        assert p >= 2.0
        self.p = float(p)
        self._factor = 1.0 / float(r_max)
        # 2048 rows x 128 lanes x 4 B = 1 MiB per f32 block; double-buffered
        # in + out (4 MiB) stays well under the default scoped-VMEM limit on
        # every chip while reaching ~85% of HBM roofline.
        self._max_block_rows = int(max_block_rows)
        # Below this size the kernel's fixed overhead / extra HBM round trip
        # loses to a plain fusible jnp expression.
        self._min_pallas_size = int(min_pallas_size)

    def __call__(self, x: jax.Array) -> jax.Array:
        assert x.ndim == 1, "expects a 1-D tensor of edge lengths"
        n = x.shape[0]
        if n == 0:
            return x
        if n < self._min_pallas_size:
            # Tiny input: let XLA fuse the elementwise math into neighbors.
            return _poly_cutoff_ref(x, self._factor, self.p).astype(x.dtype)

        itemsize = jnp.dtype(x.dtype).itemsize
        # dtype-aware minimum sublane count: 8 (f32), 16 (bf16), 32 (int8/fp8)
        sublane_min = max(8, 32 // itemsize)

        # Load-balanced blocking: round rows to the sublane tile, then split
        # into grid_steps roughly-equal blocks.  Padding overhead is at most
        # grid_steps * sublane_min rows (negligible) instead of up to one
        # whole block.
        rows_min = _round_up(pl.cdiv(n, _LANES), sublane_min)
        grid_steps = pl.cdiv(rows_min, self._max_block_rows)
        block_rows = _round_up(pl.cdiv(rows_min, grid_steps), sublane_min)
        rows = grid_steps * block_rows
        n_pad = rows * _LANES

        # Single pad op (no zeros+scatter); skipped entirely when aligned.
        x_pad = x if n_pad == n else jnp.pad(x, (0, n_pad - n))
        x2d = x_pad.reshape(rows, _LANES)

        kernel = functools.partial(
            _poly_cutoff_kernel, factor=self._factor, p=self.p
        )

        out2d = pl.pallas_call(
            kernel,
            out_shape=jax.ShapeDtypeStruct((rows, _LANES), x.dtype),
            grid_spec=pltpu.PrefetchScalarGridSpec(
                num_scalar_prefetch=0,
                grid=(grid_steps,),
                in_specs=[pl.BlockSpec((block_rows, _LANES), lambda i: (i, 0))],
                out_specs=pl.BlockSpec((block_rows, _LANES), lambda i: (i, 0)),
            ),
            compiler_params=pltpu.CompilerParams(
                dimension_semantics=("parallel",),
            ),
            cost_estimate=pl.CostEstimate(
                flops=9 * n_pad,
                transcendentals=0,
                bytes_accessed=2 * n_pad * itemsize,
            ),
        )(x2d)

        out = out2d.reshape(-1)
        return out if n_pad == n else out[:n]


if __name__ == "__main__":
    key = jax.random.PRNGKey(0)
    r_max = 4.5
    p = 6.0

    def check(num_edges: int, cutoff: PolynominalCutoff):
        k = jax.random.fold_in(key, num_edges)
        # Edge lengths in [0, 1.25 * r_max) so some fall beyond the cutoff.
        x = jax.random.uniform(
            k, (num_edges,), dtype=jnp.float32, minval=0.0, maxval=1.25 * r_max
        )
        out = jax.block_until_ready(cutoff(x))
        ref = _poly_cutoff_ref(x, 1.0 / r_max, p)
        assert out.shape == x.shape and out.dtype == x.dtype
        assert jnp.allclose(out, ref, atol=1e-4, rtol=1e-5), "mismatch vs reference"

    # small input -> fused pure-jnp bypass path
    check(300, PolynominalCutoff(r_max=r_max, p=p))
    # medium input, not a multiple of 128 -> single large Pallas block + pad
    check(5000, PolynominalCutoff(r_max=r_max, p=p))
    # exercise the multi-block grid / load-balanced blocking path cheaply
    check(5000, PolynominalCutoff(r_max=r_max, p=p, max_block_rows=16))
    # aligned input -> zero-pad fast path
    check(4096, PolynominalCutoff(r_max=r_max, p=p))

    print("KERNEL_OK")
</pallas_src>

<mosaic_0001>
module attributes {stable_mosaic.version = 11 : i64} {
  func.func @_poly_cutoff_kernel(%arg0: i32, %arg1: memref<40x128xf32, #tpu.memory_space<vmem>>, %arg2: memref<40x128xf32, #tpu.memory_space<vmem>>) attributes {dimension_semantics = [#tpu.dimension_semantics<parallel>], iteration_bounds = array<i64: 1>, scalar_prefetch = 0 : i64, scratch_operands = 0 : i64, tpu.core_type = #tpu.core_type<tc>, window_params = [{transform_indices = @transform_0, window_bounds = array<i64: 40, 128>}, {transform_indices = @transform_1, window_bounds = array<i64: 40, 128>}]} {
    %c0 = arith.constant 0 : index
    %c0_0 = arith.constant 0 : index
    %0 = vector.load %arg1[%c0, %c0_0] : memref<40x128xf32, #tpu.memory_space<vmem>>, vector<40x128xf32>
    %cst = arith.constant 0.222222224 : f32
    %1 = vector.broadcast %cst : f32 to vector<40x128xf32>
    %2 = arith.mulf %0, %1 : vector<40x128xf32>
    %3 = arith.mulf %2, %2 : vector<40x128xf32>
    %4 = arith.mulf %3, %3 : vector<40x128xf32>
    %5 = arith.mulf %3, %4 : vector<40x128xf32>
    %cst_1 = arith.constant 2.100000e+01 : f32
    %6 = vector.broadcast %cst_1 : f32 to vector<40x128xf32>
    %7 = arith.mulf %6, %2 : vector<40x128xf32>
    %cst_2 = arith.constant 4.800000e+01 : f32
    %8 = vector.broadcast %cst_2 : f32 to vector<40x128xf32>
    %9 = arith.subf %8, %7 : vector<40x128xf32>
    %10 = arith.mulf %2, %9 : vector<40x128xf32>
    %cst_3 = arith.constant 2.800000e+01 : f32
    %11 = vector.broadcast %cst_3 : f32 to vector<40x128xf32>
    %12 = arith.subf %11, %10 : vector<40x128xf32>
    %13 = arith.mulf %5, %12 : vector<40x128xf32>
    %cst_4 = arith.constant 1.000000e+00 : f32
    %14 = vector.broadcast %cst_4 : f32 to vector<40x128xf32>
    %15 = arith.subf %14, %13 : vector<40x128xf32>
    %cst_5 = arith.constant 1.000000e+00 : f32
    %16 = vector.broadcast %cst_5 : f32 to vector<40x128xf32>
    %17 = arith.cmpf olt, %2, %16 : vector<40x128xf32>
    %cst_6 = arith.constant 0.000000e+00 : f32
    %18 = vector.broadcast %cst_6 : f32 to vector<40x128xf32>
    %19 = arith.select %17, %15, %18 : vector<40x128xi1>, vector<40x128xf32>
    %c0_7 = arith.constant 0 : index
    %c0_8 = arith.constant 0 : index
    %20 = vector.load %arg2[%c0_7, %c0_8] : memref<40x128xf32, #tpu.memory_space<vmem>>, vector<40x128xf32>
    tpu.vector_store %arg2[%c0_7, %c0_8], %19 {strides = array<i32>} : memref<40x128xf32, #tpu.memory_space<vmem>>, vector<40x128xf32>,
    return
  }
  func.func @transform_0(%arg0: i32) -> (i32, i32) {
    %c0_i32 = arith.constant 0 : i32
    %c0_i32_0 = arith.constant 0 : i32
    return %arg0, %c0_i32 : i32, i32
  }
  func.func @transform_1(%arg0: i32) -> (i32, i32) {
    %c0_i32 = arith.constant 0 : i32
    %c0_i32_0 = arith.constant 0 : i32
    return %arg0, %c0_i32 : i32, i32
  }
}

</mosaic_0001>

<llo_original>
// kernel: tpu_custom_call.1
$region0: #{tpu_custom_call.1}
  #allocation0 [shape = 'u32[]', space=smem, size = 0x4, offset = 0x4, fixed_abs, tag = 'smem constant byte address 0x4 - core index']
  #allocation1 [shape = 'u32[144,128]{1,0:T(1,128)}', space=vmem, size = 0x12000, scoped, tag = 'internal scratch']
  %s0 = inlined_call_operand.hbm [shape: f32[40,128], index: 0, kind: input, shape index: {}]
  %s1 = inlined_call_operand.hbm [shape: f32[40,128], index: 1, kind: output, shape index: {}]
  %s2 = sld [smem:[#allocation0]]
  $region18: #{tpu_custom_call.1} parent=0
    _
  %s4 = ssub.s32 1, %s2
  %s5 = scalar_select 0, %s4, %s2
  $region1: #{tpu_custom_call.1} parent=0
    #allocation2 [shape = 'u8[20480]{0}', space=vmem, size = 0x5000, scoped, tag = 'input window, operand 0, single buffered']
    #allocation3 [shape = 's32[1]{0}', space=sflag, size = 0x4, scoped, tag = 'scoped memory for tpu_custom_call.1']
    #allocation4 [shape = 's32[1]{0}', space=sflag, size = 0x4, scoped, tag = 'scoped memory for tpu_custom_call.1']
    #allocation5 [shape = 'u8[20480]{0}', space=vmem, size = 0x5000, scoped, tag = 'output window, operand 0, single buffered']
    %6 = vsyncpa [#allocation3], 0
    %7 = vsyncpa [#allocation4], 0
    // Predicated region
    $region2: #{tpu_custom_call.1} parent=1 // pred_check
      _
    $region3: #{tpu_custom_call.1} parent=1 // pred_check_branch
      %9 = sbr.rel (0) target = $region5
    $region4: #{tpu_custom_call.1} parent=1 // pred_region
      %s11 = ssub.s32 640, 640
      %12 = vsyncadd [#allocation3], %s11
      %s13 = sshll.u32 [#allocation2], 4
      %s14 = int_to_ptr.vmem [resolvable:$true] %s13
      %19 = dma.hbm_to_vmem [thread:$0]  %s0, 640, %s14, [#allocation3], 128, 128, 8
    $region5: #{tpu_custom_call.1} parent=1 // pred_fallthru
      _
    // Predicated region
    $region6: #{tpu_custom_call.1} parent=1 // pred_check
      _
    $region7: #{tpu_custom_call.1} parent=1 // pred_check_branch
      %21 = sbr.rel (0) target = $region9
    $region8: #{tpu_custom_call.1} parent=1 // pred_region
      %22 = dma.done [#allocation3], 640
    $region9: #{tpu_custom_call.1} parent=1 // pred_fallthru
      _
    %v23 = vld [vmem:[#allocation2] sm:$0xff]
    %v24 = vld [vmem:[#allocation2 + $0x8] sm:$0xff]
    %v25 = vld [vmem:[#allocation2 + $0x10] sm:$0xff]
    %v26 = vld [vmem:[#allocation2 + $0x18] sm:$0xff]
    %v27 = vld [vmem:[#allocation2 + $0x20] sm:$0xff]
    %v28 = vmul.f32 %v23, 0.22222222
    %v29 = vmul.f32 %v24, 0.22222222
    %v30 = vmul.f32 %v25, 0.22222222
    %v31 = vmul.f32 %v26, 0.22222222
    %v32 = vmul.f32 %v27, 0.22222222
    %v33 = vmul.f32 %v28, %v28
    %v34 = vmul.f32 %v29, %v29
    %v35 = vmul.f32 %v30, %v30
    %v36 = vmul.f32 %v31, %v31
    %v37 = vmul.f32 %v32, %v32
    %v38 = vmul.f32 %v33, %v33
    %v39 = vmul.f32 %v34, %v34
    %v40 = vmul.f32 %v35, %v35
    %v41 = vmul.f32 %v36, %v36
    %v42 = vmul.f32 %v37, %v37
    %v43 = vmul.f32 %v33, %v38
    %v44 = vmul.f32 %v34, %v39
    %v45 = vmul.f32 %v35, %v40
    %v46 = vmul.f32 %v36, %v41
    %v47 = vmul.f32 %v37, %v42
    %v48 = vmul.f32 %v28, 21.0
    %v49 = vmul.f32 %v29, 21.0
    %v50 = vmul.f32 %v30, 21.0
    %v51 = vmul.f32 %v31, 21.0
    %v52 = vmul.f32 %v32, 21.0
    %v53 = vsub.f32 48.0, %v48
    %v54 = vsub.f32 48.0, %v49
    %v55 = vsub.f32 48.0, %v50
    %v56 = vsub.f32 48.0, %v51
    %v57 = vsub.f32 48.0, %v52
    %v58 = vmul.f32 %v28, %v53
    %v59 = vmul.f32 %v29, %v54
    %v60 = vmul.f32 %v30, %v55
    %v61 = vmul.f32 %v31, %v56
    %v62 = vmul.f32 %v32, %v57
    %v63 = vsub.f32 28.0, %v58
    %v64 = vsub.f32 28.0, %v59
    %v65 = vsub.f32 28.0, %v60
    %v66 = vsub.f32 28.0, %v61
    %v67 = vsub.f32 28.0, %v62
    %v68 = vmul.f32 %v43, %v63
    %v69 = vmul.f32 %v44, %v64
    %v70 = vmul.f32 %v45, %v65
    %v71 = vmul.f32 %v46, %v66
    %v72 = vmul.f32 %v47, %v67
    %v73 = vsub.f32 1.0, %v68
    %v74 = vsub.f32 1.0, %v69
    %v75 = vsub.f32 1.0, %v70
    %v76 = vsub.f32 1.0, %v71
    %v77 = vsub.f32 1.0, %v72
    %vm78 = vcmp.lt.f32.partialorder %v28, 1.0
    %vm79 = vcmp.lt.f32.partialorder %v29, 1.0
    %vm80 = vcmp.lt.f32.partialorder %v30, 1.0
    %vm81 = vcmp.lt.f32.partialorder %v31, 1.0
    %vm82 = vcmp.lt.f32.partialorder %v32, 1.0
    %v83 = vsel %vm78, %v73, 0.0
    %v84 = vsel %vm79, %v74, 0.0
    %v85 = vsel %vm80, %v75, 0.0
    %v86 = vsel %vm81, %v76, 0.0
    %v87 = vsel %vm82, %v77, 0.0
    %88 = vst [vmem:[#allocation5] sm:$0xff] %v83
    %89 = vst [vmem:[#allocation5 + $0x8] sm:$0xff] %v84
    %90 = vst [vmem:[#allocation5 + $0x10] sm:$0xff] %v85
    %91 = vst [vmem:[#allocation5 + $0x18] sm:$0xff] %v86
    %92 = vst [vmem:[#allocation5 + $0x20] sm:$0xff] %v87
    // Predicated region
    $region10: #{tpu_custom_call.1} parent=1 // pred_check
      _
    $region11: #{tpu_custom_call.1} parent=1 // pred_check_branch
      %94 = sbr.rel (0) target = $region13
    $region12: #{tpu_custom_call.1} parent=1 // pred_region
      %s96 = ssub.s32 640, 640
      %97 = vsyncadd [#allocation4], %s96
      %s98 = sshll.u32 [#allocation5], 4
      %s99 = int_to_ptr.vmem [resolvable:$true] %s98
      %104 = dma.vmem_to_hbm [thread:$0]  %s99, 640, %s1, [#allocation4], 128, 128, 8
    $region13: #{tpu_custom_call.1} parent=1 // pred_fallthru
      _
    // Predicated region
    $region14: #{tpu_custom_call.1} parent=1 // pred_check
      _
    $region15: #{tpu_custom_call.1} parent=1 // pred_check_branch
      %106 = sbr.rel (0) target = $region17
    $region16: #{tpu_custom_call.1} parent=1 // pred_region
      %107 = dma.done [#allocation4], 640
    $region17: #{tpu_custom_call.1} parent=1 // pred_fallthru
      _
    %108 = vsyncpa [#allocation3], 1
    %109 = vsyncpa [#allocation4], 1

</llo_original>
